<compile_context>
chip_gen: v7x
topology: tpu7x:2x2x1
jax: 0.10.0
libtpu: 0.0.40
codegen_flags: <defaults>
</compile_context>

<pallas_src>
import functools

import numpy as np
import jax
import jax.numpy as jnp
from jax import lax
from jax.experimental import pallas as pl
from jax.experimental.pallas import tpu as pltpu


def _mixblock1_kernel(x_ref, w_ref, v_ref, o_ref):
    """One batch-tile of the fused MixBlock1 forward (transposed layout).

    x_ref : (1, bt, W, CinH)  activations; rows=(b,w) on sublanes, (ci,h) on lanes
    w_ref : (4, CinH, CoutH)  fused weights [M0^T, M1^T, M2^T, U^T] / 3
                              (grouped+dense conv fusion and the H-direction
                               circular tap shifts are pre-folded in)
    v_ref : (W, W)            FLinear2d V row mixer
    o_ref : (1, bt, W, CoutH) relu((gconv + conv + lin) / 3)
    """
    _, bt, wdim, cin_h = x_ref.shape
    btw = bt * wdim
    cdt = x_ref.dtype

    x3 = x_ref[0]                          # (bt, W, CinH)
    x2 = x3.reshape(btw, cin_h)            # (BtW, CinH); W multiple of 8 -> layout-free

    # -- centre conv tap (kx = 1): the activations themselves.
    pre = jnp.dot(x2, w_ref[1], preferred_element_type=jnp.float32)

    # -- kx = 0 tap needs x[..., (w-1) % W]: circular roll (+1) along the per-batch
    #    W sublane axis.  XLU rotate, exact, no MXU permutation matmul.
    xm = pltpu.roll(x3, 1, axis=1).reshape(btw, cin_h)
    pre = pre + jnp.dot(xm, w_ref[0], preferred_element_type=jnp.float32)

    # -- kx = 2 tap needs x[..., (w+1) % W]: roll by -1 == W-1 (non-negative shift).
    xp = pltpu.roll(x3, wdim - 1, axis=1).reshape(btw, cin_h)
    pre = pre + jnp.dot(xp, w_ref[2], preferred_element_type=jnp.float32)

    # -- FLinear2d: t_b = V @ x_b per folded batch element (tiny K=W dots; cost is
    #    linear in bt, no kron(I_bt, V) lane mixer), then one dot against U^T/3.
    v = v_ref[...]
    t_blocks = [
        jnp.dot(v, x3[b], preferred_element_type=jnp.float32).astype(cdt)
        for b in range(bt)
    ]
    t2 = t_blocks[0] if bt == 1 else jnp.concatenate(t_blocks, axis=0)
    pre = pre + jnp.dot(t2, w_ref[3], preferred_element_type=jnp.float32)

    # 1/3 is folded into w_ref: just the relu and one lane-dense store.
    o_ref[0] = jnp.maximum(pre, 0.0).reshape(bt, wdim, -1).astype(o_ref.dtype)


def prepare_mixblock1_weights(params, *, in_ch, out_ch, G, h, w,
                              compute_dtype=jnp.bfloat16):
    """Fold MixBlock1's three linear branches into one weight stack.

    Call ONCE per parameter update (hoisted out of the per-forward jit).
      w_stack[kx] (kx=0..2): transposed block-circulant conv matrices absorbing
                   (a) the grouped conv (group-shared weight == dense conv with
                   kron(I_G, Wg)), (b) the dense conv, and (c) the H-direction
                   circular shift of tap ky -- all scaled by 1/3.
      w_stack[3] : U^T / 3 of the factorized FLinear2d.
      v_mat      : FLinear2d V (W, W), applied inside the kernel.
    """
    wg, wc, U, V = params
    Cin, Cout = in_ch * G, out_ch * G
    CinH, CoutH = Cin * h, Cout * h
    f32 = jnp.float32

    # Grouped conv with a group-shared weight == dense conv with kron(I_G, Wg).
    eye_g = jnp.eye(G, dtype=f32)
    wf = wc.astype(f32) + jnp.einsum(
        "gh,oikl->gohikl", eye_g, wg.astype(f32)).reshape(Cout, Cin, 3, 3)

    # Per W-tap kx, absorb the H-direction circular shift into a block-circulant
    # matrix M_kx[(co,h),(ci,h')] = sum_ky wf[co,ci,ky,kx] * [h' == (h+ky-1) % H].
    eye_h = jnp.eye(h, dtype=f32)
    blocks = []
    for kx in range(3):
        m = jnp.zeros((CoutH, CinH), f32)
        for ky in range(3):
            s = jnp.roll(eye_h, ky - 1, axis=1)     # S_d[h,h'] = [h' == (h+d) % H]
            m = m + jnp.kron(wf[:, :, ky, kx], s)
        blocks.append(m.T)                          # (CinH, CoutH)
    blocks.append(U.astype(f32).T)                  # (CinH, CoutH) FLinear2d U block
    w_stack = (jnp.stack(blocks, axis=0) / 3.0).astype(compute_dtype)
    v_mat = V.astype(compute_dtype)
    return w_stack, v_mat


def _pick_bt(B, W):
    """Rows per grid step = bt*W.  Target a few hundred rows (amortizes the
    ~0.35us per-step pipeline overhead and fills the MXU M dimension), but keep
    nbt >= 2 when that does not shrink the tile below ~128 rows, so
    dimension_semantics=("parallel",) can split the grid across v7x's two
    TensorCores (irrelevant on single-TC v5e/v6e, where bigger bt is better)."""
    bt = 1
    for cand in range(1, B + 1):
        if B % cand == 0 and cand * W <= 512:
            bt = cand
    if B // bt == 1:
        for cand in range(bt - 1, 0, -1):
            if B % cand == 0 and cand * W >= 128:
                bt = cand
                break
    return bt


def mixblock1_forward_bwch(x_bwch, w_stack, v_mat, *, bt=None):
    """MixBlock1 forward on activations in the persistent (B, W, Cin*H) layout
    (rows = w, lanes = (ci, h)); returns (B, W, Cout*H).  Keeping this layout
    across adjacent blocks avoids the NCHW transpose round trips entirely."""
    B, W, CinH = x_bwch.shape
    assert w_stack.shape[1] == CinH
    CoutH = w_stack.shape[2]
    if bt is None:
        bt = _pick_bt(B, W)
    assert B % bt == 0
    nbt = B // bt
    cdt = w_stack.dtype

    # Note: W is expected to be a multiple of 8 (module default w=16) so the
    # in-kernel (bt, W, CinH) <-> (bt*W, CinH) reshapes stay sublane-aligned.
    x_t = x_bwch.astype(cdt).reshape(nbt, bt, W, CinH)

    out = pl.pallas_call(
        _mixblock1_kernel,
        out_shape=jax.ShapeDtypeStruct((nbt, bt, W, CoutH), jnp.float32),
        grid_spec=pltpu.PrefetchScalarGridSpec(
            num_scalar_prefetch=0,
            grid=(nbt,),
            in_specs=[
                pl.BlockSpec((1, bt, W, CinH), lambda b: (b, 0, 0, 0)),
                pl.BlockSpec((4, CinH, CoutH), lambda b: (0, 0, 0)),
                pl.BlockSpec((W, W), lambda b: (0, 0)),
            ],
            out_specs=pl.BlockSpec((1, bt, W, CoutH), lambda b: (b, 0, 0, 0)),
        ),
        compiler_params=pltpu.CompilerParams(
            dimension_semantics=("parallel",)),
    )(x_t, w_stack, v_mat)
    return out.reshape(B, W, CoutH)


def mixblock1_forward(x, w_stack, v_mat, *, bt=None):
    """Drop-in NCHW forward: relu((gconv(x) + conv(x) + flinear(x)) / 3)."""
    B, Cin, H, W = x.shape
    CoutH = w_stack.shape[2]
    Cout = CoutH // H
    # TODO(synk): these NCHW <-> (B, W, C*H) transposes are two extra HBM passes;
    # keep the (B, W, C*H) layout persistent across MixBlocks (use
    # mixblock1_forward_bwch) -- a BlockSpec index_map cannot express the permute,
    # so it cannot be folded into the kernel's own DMA.
    x_t = x.transpose(0, 3, 1, 2).reshape(B, W, Cin * H)        # rows=w, lanes=(ci,h)
    out_t = mixblock1_forward_bwch(x_t, w_stack, v_mat, bt=bt)
    return out_t.reshape(B, W, Cout, H).transpose(0, 2, 3, 1)   # back to NCHW


def init_params(key, *, in_ch, out_ch, G, h, w):
    """Deterministic synthetic init matching the shapes in MixBlock1.__init__."""
    Cin, Cout = in_ch * G, out_ch * G
    k1, k2, k3, k4 = jax.random.split(key, 4)
    b_g = float(np.sqrt(6.0 / (in_ch * 9)))        # kaiming_uniform (relu)
    wg = jax.random.uniform(k1, (out_ch, in_ch, 3, 3), jnp.float32, -b_g, b_g)
    b_c = float(np.sqrt(6.0 / (Cin * 9)))
    wc = jax.random.uniform(k2, (Cout, Cin, 3, 3), jnp.float32, -b_c, b_c)
    b_u = float(1.0 / np.sqrt(Cin * h))            # nn.Linear default bound
    U = jax.random.uniform(k3, (Cout * h, Cin * h), jnp.float32, -b_u, b_u)
    b_v = float(1.0 / np.sqrt(w))
    V = jax.random.uniform(k4, (w, w), jnp.float32, -b_v, b_v)
    return wg, wc, U, V


def reference(x, params, *, in_ch, out_ch, G):
    """Pure-JAX reference for the same forward pass (independent conv lowering)."""
    wg, wc, U, V = params
    B, Cin, H, W = x.shape
    Cout = out_ch * G
    xp = jnp.pad(x, ((0, 0), (0, 0), (1, 1), (1, 1)), mode="wrap")
    dn = ("NCHW", "OIHW", "NCHW")
    conv_out = lax.conv_general_dilated(
        xp, wc, (1, 1), "VALID", dimension_numbers=dn,
        precision=lax.Precision.HIGHEST)
    gconv_out = lax.conv_general_dilated(
        xp, jnp.tile(wg, (G, 1, 1, 1)), (1, 1), "VALID", dimension_numbers=dn,
        feature_group_count=G, precision=lax.Precision.HIGHEST)
    x2 = x.reshape(B, Cin * H, W)
    t = jnp.einsum("bjw,vw->bjv", x2, V, precision=lax.Precision.HIGHEST)
    lin = jnp.einsum("ij,bjv->biv", U, t, precision=lax.Precision.HIGHEST)
    lin = lin.reshape(B, Cout, H, W)
    return jax.nn.relu((gconv_out + conv_out + lin) / 3.0)


if __name__ == "__main__":
    in_ch, out_ch, G = 2, 2, 4          # MixBlock1(in_ch=2, out_ch=2, h=16, w=16, G=4)
    B, H, W = 2, 16, 16
    key = jax.random.PRNGKey(0)
    k_x, k_p, k_x2 = jax.random.split(key, 3)
    x = jax.random.normal(k_x, (B, in_ch * G, H, W), jnp.float32)   # NCHW
    params = init_params(k_p, in_ch=in_ch, out_ch=out_ch, G=G, h=H, w=W)
    ref = reference(x, params, in_ch=in_ch, out_ch=out_ch, G=G)

    fwd = jax.jit(mixblock1_forward)

    # 1) Exact path (compute_dtype=f32) vs the HIGHEST-precision reference.
    w_f32, v_f32 = prepare_mixblock1_weights(
        params, in_ch=in_ch, out_ch=out_ch, G=G, h=H, w=W,
        compute_dtype=jnp.float32)
    out_f32 = jax.block_until_ready(fwd(x, w_f32, v_f32))
    assert out_f32.shape == (B, out_ch * G, H, W)
    np.testing.assert_allclose(np.asarray(out_f32), np.asarray(ref),
                               atol=2e-3, rtol=2e-3)

    # 2) Default bf16 MXU path (f32 accumulation): looser tolerance vs the f32 ref.
    w_bf16, v_bf16 = prepare_mixblock1_weights(
        params, in_ch=in_ch, out_ch=out_ch, G=G, h=H, w=W)
    out_bf16 = jax.block_until_ready(fwd(x, w_bf16, v_bf16))
    np.testing.assert_allclose(np.asarray(out_bf16), np.asarray(ref),
                               atol=1e-1, rtol=1e-1)

    # 3) Multi-tile path (nbt > 1): exercises the grid index_map, batch folding
    #    and the inverse output transpose.
    B2 = 4
    x2 = jax.random.normal(k_x2, (B2, in_ch * G, H, W), jnp.float32)
    ref2 = reference(x2, params, in_ch=in_ch, out_ch=out_ch, G=G)
    fwd_tiled = jax.jit(functools.partial(mixblock1_forward, bt=1))
    out2 = jax.block_until_ready(fwd_tiled(x2, w_f32, v_f32))
    np.testing.assert_allclose(np.asarray(out2), np.asarray(ref2),
                               atol=2e-3, rtol=2e-3)

    print("KERNEL_OK")
</pallas_src>

<mosaic_0001>
module attributes {stable_mosaic.version = 11 : i64} {
  func.func @_mixblock1_kernel(%arg0: i32, %arg1: memref<1x2x16x128xf32, #tpu.memory_space<vmem>>, %arg2: memref<4x128x128xf32, #tpu.memory_space<vmem>>, %arg3: memref<16x16xf32, #tpu.memory_space<vmem>>, %arg4: memref<1x2x16x128xf32, #tpu.memory_space<vmem>>) attributes {dimension_semantics = [#tpu.dimension_semantics<parallel>], iteration_bounds = array<i64: 1>, scalar_prefetch = 0 : i64, scratch_operands = 0 : i64, tpu.core_type = #tpu.core_type<tc>, window_params = [{transform_indices = @transform_0, window_bounds = array<i64: 1, 2, 16, 128>}, {pipeline_mode = #tpu.pipeline_mode<synchronous>, transform_indices = @transform_1, window_bounds = array<i64: 4, 128, 128>}, {pipeline_mode = #tpu.pipeline_mode<synchronous>, transform_indices = @transform_2, window_bounds = array<i64: 16, 16>}, {transform_indices = @transform_3, window_bounds = array<i64: 1, 2, 16, 128>}]} {
    %c0 = arith.constant 0 : index
    %c0_0 = arith.constant 0 : index
    %c0_1 = arith.constant 0 : index
    %c0_2 = arith.constant 0 : index
    %0 = vector.load %arg1[%c0, %c0_0, %c0_1, %c0_2] : memref<1x2x16x128xf32, #tpu.memory_space<vmem>>, vector<1x2x16x128xf32>
    %1 = vector.shape_cast %0 : vector<1x2x16x128xf32> to vector<2x16x128xf32>
    %2 = vector.shape_cast %1 : vector<2x16x128xf32> to vector<32x128xf32>
    %c1 = arith.constant 1 : index
    %c0_3 = arith.constant 0 : index
    %c0_4 = arith.constant 0 : index
    %3 = vector.load %arg2[%c1, %c0_3, %c0_4] : memref<4x128x128xf32, #tpu.memory_space<vmem>>, vector<1x128x128xf32>
    %4 = vector.shape_cast %3 : vector<1x128x128xf32> to vector<128x128xf32>
    %cst = arith.constant dense<0.000000e+00> : vector<32x128xf32>
    %5 = tpu.matmul %2, %4, %cst {dimension_numbers = #tpu.dot_dimension_numbers<[1], [0], [0], [1], [0, 0, 1, 1], [], []>} : vector<32x128xf32>, vector<128x128xf32>, vector<32x128xf32> -> vector<32x128xf32>
    %c1_i32 = arith.constant 1 : i32
    %6 = tpu.dynamic_rotate %1 by %c1_i32 dim 1 : vector<2x16x128xf32>, i32 -> vector<2x16x128xf32>
    %7 = vector.shape_cast %6 : vector<2x16x128xf32> to vector<32x128xf32>
    %c0_5 = arith.constant 0 : index
    %c0_6 = arith.constant 0 : index
    %c0_7 = arith.constant 0 : index
    %8 = vector.load %arg2[%c0_5, %c0_6, %c0_7] : memref<4x128x128xf32, #tpu.memory_space<vmem>>, vector<1x128x128xf32>
    %9 = vector.shape_cast %8 : vector<1x128x128xf32> to vector<128x128xf32>
    %cst_8 = arith.constant dense<0.000000e+00> : vector<32x128xf32>
    %10 = tpu.matmul %7, %9, %cst_8 {dimension_numbers = #tpu.dot_dimension_numbers<[1], [0], [0], [1], [0, 0, 1, 1], [], []>} : vector<32x128xf32>, vector<128x128xf32>, vector<32x128xf32> -> vector<32x128xf32>
    %11 = arith.addf %5, %10 : vector<32x128xf32>
    %c15_i32 = arith.constant 15 : i32
    %12 = tpu.dynamic_rotate %1 by %c15_i32 dim 1 : vector<2x16x128xf32>, i32 -> vector<2x16x128xf32>
    %13 = vector.shape_cast %12 : vector<2x16x128xf32> to vector<32x128xf32>
    %c2 = arith.constant 2 : index
    %c0_9 = arith.constant 0 : index
    %c0_10 = arith.constant 0 : index
    %14 = vector.load %arg2[%c2, %c0_9, %c0_10] : memref<4x128x128xf32, #tpu.memory_space<vmem>>, vector<1x128x128xf32>
    %15 = vector.shape_cast %14 : vector<1x128x128xf32> to vector<128x128xf32>
    %cst_11 = arith.constant dense<0.000000e+00> : vector<32x128xf32>
    %16 = tpu.matmul %13, %15, %cst_11 {dimension_numbers = #tpu.dot_dimension_numbers<[1], [0], [0], [1], [0, 0, 1, 1], [], []>} : vector<32x128xf32>, vector<128x128xf32>, vector<32x128xf32> -> vector<32x128xf32>
    %17 = arith.addf %11, %16 : vector<32x128xf32>
    %c0_12 = arith.constant 0 : index
    %c0_13 = arith.constant 0 : index
    %18 = vector.load %arg3[%c0_12, %c0_13] : memref<16x16xf32, #tpu.memory_space<vmem>>, vector<16x16xf32>
    %19 = vector.extract_strided_slice %1 {offsets = [0, 0, 0], sizes = [1, 16, 128], strides = [1, 1, 1]} : vector<2x16x128xf32> to vector<1x16x128xf32>
    %20 = vector.shape_cast %19 : vector<1x16x128xf32> to vector<16x128xf32>
    %cst_14 = arith.constant dense<0.000000e+00> : vector<16x128xf32>
    %21 = tpu.matmul %18, %20, %cst_14 {dimension_numbers = #tpu.dot_dimension_numbers<[1], [0], [0], [1], [0, 0, 1, 1], [], []>} : vector<16x16xf32>, vector<16x128xf32>, vector<16x128xf32> -> vector<16x128xf32>
    %22 = vector.extract_strided_slice %1 {offsets = [1, 0, 0], sizes = [1, 16, 128], strides = [1, 1, 1]} : vector<2x16x128xf32> to vector<1x16x128xf32>
    %23 = vector.shape_cast %22 : vector<1x16x128xf32> to vector<16x128xf32>
    %cst_15 = arith.constant dense<0.000000e+00> : vector<16x128xf32>
    %24 = tpu.matmul %18, %23, %cst_15 {dimension_numbers = #tpu.dot_dimension_numbers<[1], [0], [0], [1], [0, 0, 1, 1], [], []>} : vector<16x16xf32>, vector<16x128xf32>, vector<16x128xf32> -> vector<16x128xf32>
    %25 = tpu.concatenate %21, %24 in 0 : vector<16x128xf32>, vector<16x128xf32> -> vector<32x128xf32>
    %c3 = arith.constant 3 : index
    %c0_16 = arith.constant 0 : index
    %c0_17 = arith.constant 0 : index
    %26 = vector.load %arg2[%c3, %c0_16, %c0_17] : memref<4x128x128xf32, #tpu.memory_space<vmem>>, vector<1x128x128xf32>
    %27 = vector.shape_cast %26 : vector<1x128x128xf32> to vector<128x128xf32>
    %cst_18 = arith.constant dense<0.000000e+00> : vector<32x128xf32>
    %28 = tpu.matmul %25, %27, %cst_18 {dimension_numbers = #tpu.dot_dimension_numbers<[1], [0], [0], [1], [0, 0, 1, 1], [], []>} : vector<32x128xf32>, vector<128x128xf32>, vector<32x128xf32> -> vector<32x128xf32>
    %29 = arith.addf %17, %28 : vector<32x128xf32>
    %cst_19 = arith.constant 0.000000e+00 : f32
    %30 = vector.broadcast %cst_19 : f32 to vector<32x128xf32>
    %31 = arith.maximumf %29, %30 : vector<32x128xf32>
    %32 = vector.shape_cast %31 : vector<32x128xf32> to vector<2x16x128xf32>
    %c0_20 = arith.constant 0 : index
    %c0_21 = arith.constant 0 : index
    %c0_22 = arith.constant 0 : index
    %c0_23 = arith.constant 0 : index
    %33 = vector.load %arg4[%c0_20, %c0_21, %c0_22, %c0_23] : memref<1x2x16x128xf32, #tpu.memory_space<vmem>>, vector<1x2x16x128xf32>
    %34 = vector.shape_cast %33 : vector<1x2x16x128xf32> to vector<2x16x128xf32>
    %35 = vector.shape_cast %32 : vector<2x16x128xf32> to vector<1x2x16x128xf32>
    tpu.vector_store %arg4[%c0_20, %c0_21, %c0_22, %c0_23], %35 {strides = array<i32>} : memref<1x2x16x128xf32, #tpu.memory_space<vmem>>, vector<1x2x16x128xf32>,
    return
  }
  func.func @transform_0(%arg0: i32) -> (i32, i32, i32, i32) {
    %c0_i32 = arith.constant 0 : i32
    %c0_i32_0 = arith.constant 0 : i32
    %c0_i32_1 = arith.constant 0 : i32
    %c0_i32_2 = arith.constant 0 : i32
    return %arg0, %c0_i32, %c0_i32_0, %c0_i32_1 : i32, i32, i32, i32
  }
  func.func @transform_1(%arg0: i32) -> (i32, i32, i32) {
    %c0_i32 = arith.constant 0 : i32
    %c0_i32_0 = arith.constant 0 : i32
    %c0_i32_1 = arith.constant 0 : i32
    %c0_i32_2 = arith.constant 0 : i32
    return %c0_i32, %c0_i32_0, %c0_i32_1 : i32, i32, i32
  }
  func.func @transform_2(%arg0: i32) -> (i32, i32) {
    %c0_i32 = arith.constant 0 : i32
    %c0_i32_0 = arith.constant 0 : i32
    %c0_i32_1 = arith.constant 0 : i32
    return %c0_i32, %c0_i32_0 : i32, i32
  }
  func.func @transform_3(%arg0: i32) -> (i32, i32, i32, i32) {
    %c0_i32 = arith.constant 0 : i32
    %c0_i32_0 = arith.constant 0 : i32
    %c0_i32_1 = arith.constant 0 : i32
    %c0_i32_2 = arith.constant 0 : i32
    return %arg0, %c0_i32, %c0_i32_0, %c0_i32_1 : i32, i32, i32, i32
  }
}

</mosaic_0001>

<llo_original>
// kernel: mixblock1_forward.1
$region0: #{mixblock1_forward.1}
  #allocation0 [shape = 'u32[]', space=smem, size = 0x4, offset = 0x4, fixed_abs, tag = 'smem constant byte address 0x4 - core index']
  #allocation1 [shape = 'u32[144,128]{1,0:T(1,128)}', space=vmem, size = 0x12000, scoped, tag = 'internal scratch']
  %s0 = inlined_call_operand.vmem [shape: f32[1,2,16,128], index: 0, kind: input, shape index: {}]
  %s1 = inlined_call_operand.hbm [shape: f32[4,128,128], index: 1, kind: input, shape index: {}]
  %s2 = inlined_call_operand.vmem [shape: f32[16,16], index: 2, kind: input, shape index: {}]
  %s3 = inlined_call_operand.vmem [shape: f32[1,2,16,128], index: 3, kind: output, shape index: {}]
  %s4 = sld [smem:[#allocation0]]
  $region26: #{mixblock1_forward.1} parent=0
    _
  %s6 = ssub.s32 1, %s4
  %s7 = scalar_select 0, %s6, %s4
  $region1: #{mixblock1_forward.1} parent=0
    #allocation2 [shape = 'u8[262144]{0}', space=vmem, size = 0x40000, scoped, tag = 'input window, operand 1, single buffered']
    #allocation3 [shape = 's32[1]{0}', space=sflag, size = 0x4, scoped, tag = 'scoped memory for mixblock1_forward.1']
    %8 = vsyncpa [#allocation3], 0
    // Predicated region
    $region2: #{mixblock1_forward.1} parent=1 // pred_check
      _
    $region3: #{mixblock1_forward.1} parent=1 // pred_check_branch
      %10 = sbr.rel (0) target = $region5
    $region4: #{mixblock1_forward.1} parent=1 // pred_region
      _
    $region5: #{mixblock1_forward.1} parent=1 // pred_fallthru
      _
    // Predicated region
    $region6: #{mixblock1_forward.1} parent=1 // pred_check
      _
    $region7: #{mixblock1_forward.1} parent=1 // pred_check_branch
      %12 = sbr.rel (0) target = $region9
    $region8: #{mixblock1_forward.1} parent=1 // pred_region
      %s14 = ssub.s32 8192, 8192
      %15 = vsyncadd [#allocation3], %s14
      %s16 = sshll.u32 [#allocation2], 4
      %s17 = int_to_ptr.vmem [resolvable:$true] %s16
      %22 = dma.hbm_to_vmem [thread:$0]  %s1, 8192, %s17, [#allocation3], 128, 128, 8
    $region9: #{mixblock1_forward.1} parent=1 // pred_fallthru
      _
    // Predicated region
    $region10: #{mixblock1_forward.1} parent=1 // pred_check
      _
    $region11: #{mixblock1_forward.1} parent=1 // pred_check_branch
      %24 = sbr.rel (0) target = $region13
    $region12: #{mixblock1_forward.1} parent=1 // pred_region
      _
    $region13: #{mixblock1_forward.1} parent=1 // pred_fallthru
      _
    // Predicated region
    $region14: #{mixblock1_forward.1} parent=1 // pred_check
      _
    $region15: #{mixblock1_forward.1} parent=1 // pred_check_branch
      %26 = sbr.rel (0) target = $region17
    $region16: #{mixblock1_forward.1} parent=1 // pred_region
      %27 = dma.done [#allocation3], 8192
    $region17: #{mixblock1_forward.1} parent=1 // pred_fallthru
      _
    %v28 = vld [vmem:[%s0] sm:$0xff]
    %v29 = vld [vmem:[%s0 + $0x8] sm:$0xff]
    %v30 = vld [vmem:[%s0 + $0x10] sm:$0xff]
    %v31 = vld [vmem:[%s0 + $0x18] sm:$0xff]
    %s32 = scalar_lea.vmem [#allocation2], 128
    %v33 = vld [vmem:[%s32] sm:$0xff]
    %v34 = vld [vmem:[%s32 + $0x8] sm:$0xff]
    %v35 = vld [vmem:[%s32 + $0x10] sm:$0xff]
    %v36 = vld [vmem:[%s32 + $0x18] sm:$0xff]
    %v37 = vld [vmem:[%s32 + $0x20] sm:$0xff]
    %v38 = vld [vmem:[%s32 + $0x28] sm:$0xff]
    %v39 = vld [vmem:[%s32 + $0x30] sm:$0xff]
    %v40 = vld [vmem:[%s32 + $0x38] sm:$0xff]
    %v41 = vld [vmem:[%s32 + $0x40] sm:$0xff]
    %v42 = vld [vmem:[%s32 + $0x48] sm:$0xff]
    %v43 = vld [vmem:[%s32 + $0x50] sm:$0xff]
    %v44 = vld [vmem:[%s32 + $0x58] sm:$0xff]
    %v45 = vld [vmem:[%s32 + $0x60] sm:$0xff]
    %v46 = vld [vmem:[%s32 + $0x68] sm:$0xff]
    %v47 = vld [vmem:[%s32 + $0x70] sm:$0xff]
    %v48 = vld [vmem:[%s32 + $0x78] sm:$0xff]
    %v49 = vrot.slane %v28, 7
    %v50 = vrot.slane %v30, 7
    %v51 = vrot.slane %v29, 7
    %v52 = vrot.slane %v31, 7
    %v53 = vlaneseq
    %v54 = vshrl.u32 %v53, 7
    %vm55 = vcmp.lt.s32.totalorder %v54, 1
    %v56 = vsel %vm55, %v49, %v51
    %v57 = vsel %vm55, %v50, %v52
    %v58 = vsel %vm55, %v51, %v49
    %v59 = vsel %vm55, %v52, %v50
    %v60 = vld [vmem:[#allocation2] sm:$0xff]
    %v61 = vld [vmem:[#allocation2 + $0x8] sm:$0xff]
    %v62 = vld [vmem:[#allocation2 + $0x10] sm:$0xff]
    %v63 = vld [vmem:[#allocation2 + $0x18] sm:$0xff]
    %v64 = vld [vmem:[#allocation2 + $0x20] sm:$0xff]
    %v65 = vld [vmem:[#allocation2 + $0x28] sm:$0xff]
    %v66 = vld [vmem:[#allocation2 + $0x30] sm:$0xff]
    %v67 = vld [vmem:[#allocation2 + $0x38] sm:$0xff]
    %v68 = vld [vmem:[#allocation2 + $0x40] sm:$0xff]
    %v69 = vld [vmem:[#allocation2 + $0x48] sm:$0xff]
    %v70 = vld [vmem:[#allocation2 + $0x50] sm:$0xff]
    %v71 = vld [vmem:[#allocation2 + $0x58] sm:$0xff]
    %v72 = vld [vmem:[#allocation2 + $0x60] sm:$0xff]
    %v73 = vld [vmem:[#allocation2 + $0x68] sm:$0xff]
    %v74 = vld [vmem:[#allocation2 + $0x70] sm:$0xff]
    %v75 = vld [vmem:[#allocation2 + $0x78] sm:$0xff]
    %76 = vmatprep.subr.mxu0 0.0
    %77 = vmatpush1.msra.mxu0 %v60
    %78 = vmatprep.subr.mxu0 0.0
    %79 = vmatpush1.msra.mxu0 %v61
    %80 = vmatprep.subr.mxu0 0.0
    %81 = vmatpush1.msra.mxu0 %v62
    %82 = vmatprep.subr.mxu0 0.0
    %83 = vmatpush1.msra.mxu0 %v63
    %84 = vmatprep.subr.mxu0 0.0
    %85 = vmatpush1.msra.mxu0 %v64
    %86 = vmatprep.subr.mxu0 0.0
    %87 = vmatpush1.msra.mxu0 %v65
    %88 = vmatprep.subr.mxu0 0.0
    %89 = vmatpush1.msra.mxu0 %v66
    %90 = vmatprep.subr.mxu0 0.0
    %91 = vmatpush1.msra.mxu0 %v67
    %92 = vmatprep.subr.mxu0 0.0
    %93 = vmatpush1.msra.mxu0 %v68
    %94 = vmatprep.subr.mxu0 0.0
    %95 = vmatpush1.msra.mxu0 %v69
    %96 = vmatprep.subr.mxu0 0.0
    %97 = vmatpush1.msra.mxu0 %v70
    %98 = vmatprep.subr.mxu0 0.0
    %99 = vmatpush1.msra.mxu0 %v71
    %100 = vmatprep.subr.mxu0 0.0
    %101 = vmatpush1.msra.mxu0 %v72
    %102 = vmatprep.subr.mxu0 0.0
    %103 = vmatpush1.msra.mxu0 %v73
    %104 = vmatprep.subr.mxu0 0.0
    %105 = vmatpush1.msra.mxu0 %v74
    %106 = vmatprep.subr.mxu0 0.0
    %107 = vmatpush1.msra.mxu0 %v75
    %108 = vmatprep.subr.mxu0 0.0
    %109 = vmatpush1.msra.mxu0 0.0
    %110 = vmatprep.subr.mxu0 0.0
    %111 = vmatpush1.msra.mxu0 0.0
    %112 = vmatprep.subr.mxu0 0.0
    %113 = vmatpush1.msra.mxu0 0.0
    %114 = vmatprep.subr.mxu0 0.0
    %115 = vmatpush1.msra.mxu0 0.0
    %116 = vmatprep.subr.mxu0 0.0
    %117 = vmatpush1.msra.mxu0 0.0
    %118 = vmatprep.subr.mxu0 0.0
    %119 = vmatpush1.msra.mxu0 0.0
    %120 = vmatprep.subr.mxu0 0.0
    %121 = vmatpush1.msra.mxu0 0.0
    %122 = vmatprep.subr.mxu0 0.0
    %123 = vmatpush1.msra.mxu0 0.0
    %124 = vmatprep.subr.mxu0 0.0
    %125 = vmatpush1.msra.mxu0 0.0
    %126 = vmatprep.subr.mxu0 0.0
    %127 = vmatpush1.msra.mxu0 0.0
    %128 = vmatprep.subr.mxu0 0.0
    %129 = vmatpush1.msra.mxu0 0.0
    %130 = vmatprep.subr.mxu0 0.0
    %131 = vmatpush1.msra.mxu0 0.0
    %132 = vmatprep.subr.mxu0 0.0
    %133 = vmatpush1.msra.mxu0 0.0
    %134 = vmatprep.subr.mxu0 0.0
    %135 = vmatpush1.msra.mxu0 0.0
    %136 = vmatprep.subr.mxu0 0.0
    %137 = vmatpush1.msra.mxu0 0.0
    %138 = vmatprep.subr.mxu0 0.0
    %139 = vmatpush1.msra.mxu0 0.0
    %140 = vmatprep.mubr.f32.mxu0 0.0
    %141 = vmatmul.mubr.f32.gmra.mrb[0].mxu0 %v58
    %v142 = vpop.f32.mrb[0].mxu0
    %v143 = vadd.f32 0.0, %v142
    %v144 = vpop.f32.mrb[0].mxu0
    %145 = vmatprep.mubr.f32.mxu0 0.0
    %146 = vmatmul.mubr.f32.gmra.mrb[0].mxu0 %v56
    %v147 = vpop.f32.mrb[0].mxu0
    %v148 = vadd.f32 0.0, %v147
    %v149 = vpop.f32.mrb[0].mxu0
    %150 = vmatprep.mubr.f32.mxu0 0.0
    %151 = vmatmul.mubr.f32.gmra.mrb[0].mxu0 %v59
    %v152 = vpop.f32.mrb[0].mxu0
    %v153 = vadd.f32 0.0, %v152
    %v154 = vpop.f32.mrb[0].mxu0
    %155 = vmatprep.mubr.f32.mxu0 0.0
    %156 = vmatmul.mubr.f32.gmra.mrb[0].mxu0 %v57
    %v157 = vpop.f32.mrb[0].mxu0
    %v158 = vadd.f32 0.0, %v157
    %v159 = vpop.f32.mrb[0].mxu0
    %160 = vdwg.mxu0
    %161 = vmatprep.subr.mxu0 0.0
    %162 = vmatpush1.msra.mxu0 %v33
    %163 = vmatprep.subr.mxu0 0.0
    %164 = vmatpush1.msra.mxu0 %v34
    %165 = vmatprep.subr.mxu0 0.0
    %166 = vmatpush1.msra.mxu0 %v35
    %167 = vmatprep.subr.mxu0 0.0
    %168 = vmatpush1.msra.mxu0 %v36
    %169 = vmatprep.subr.mxu0 0.0
    %170 = vmatpush1.msra.mxu0 %v37
    %171 = vmatprep.subr.mxu0 0.0
    %172 = vmatpush1.msra.mxu0 %v38
    %173 = vmatprep.subr.mxu0 0.0
    %174 = vmatpush1.msra.mxu0 %v39
    %175 = vmatprep.subr.mxu0 0.0
    %176 = vmatpush1.msra.mxu0 %v40
    %177 = vmatprep.subr.mxu0 0.0
    %178 = vmatpush1.msra.mxu0 %v41
    %179 = vmatprep.subr.mxu0 0.0
    %180 = vmatpush1.msra.mxu0 %v42
    %181 = vmatprep.subr.mxu0 0.0
    %182 = vmatpush1.msra.mxu0 %v43
    %183 = vmatprep.subr.mxu0 0.0
    %184 = vmatpush1.msra.mxu0 %v44
    %185 = vmatprep.subr.mxu0 0.0
    %186 = vmatpush1.msra.mxu0 %v45
    %187 = vmatprep.subr.mxu0 0.0
    %188 = vmatpush1.msra.mxu0 %v46
    %189 = vmatprep.subr.mxu0 0.0
    %190 = vmatpush1.msra.mxu0 %v47
    %191 = vmatprep.subr.mxu0 0.0
    %192 = vmatpush1.msra.mxu0 %v48
    %193 = vmatprep.subr.mxu0 0.0
    %194 = vmatpush1.msra.mxu0 0.0
    %195 = vmatprep.subr.mxu0 0.0
    %196 = vmatpush1.msra.mxu0 0.0
    %197 = vmatprep.subr.mxu0 0.0
    %198 = vmatpush1.msra.mxu0 0.0
    %199 = vmatprep.subr.mxu0 0.0
    %200 = vmatpush1.msra.mxu0 0.0
    %201 = vmatprep.subr.mxu0 0.0
    %202 = vmatpush1.msra.mxu0 0.0
    %203 = vmatprep.subr.mxu0 0.0
    %204 = vmatpush1.msra.mxu0 0.0
    %205 = vmatprep.subr.mxu0 0.0
    %206 = vmatpush1.msra.mxu0 0.0
    %207 = vmatprep.subr.mxu0 0.0
    %208 = vmatpush1.msra.mxu0 0.0
    %209 = vmatprep.subr.mxu0 0.0
    %210 = vmatpush1.msra.mxu0 0.0
    %211 = vmatprep.subr.mxu0 0.0
    %212 = vmatpush1.msra.mxu0 0.0
    %213 = vmatprep.subr.mxu0 0.0
    %214 = vmatpush1.msra.mxu0 0.0
    %215 = vmatprep.subr.mxu0 0.0
    %216 = vmatpush1.msra.mxu0 0.0
    %217 = vmatprep.subr.mxu0 0.0
    %218 = vmatpush1.msra.mxu0 0.0
    %219 = vmatprep.subr.mxu0 0.0
    %220 = vmatpush1.msra.mxu0 0.0
    %221 = vmatprep.subr.mxu0 0.0
    %222 = vmatpush1.msra.mxu0 0.0
    %223 = vmatprep.subr.mxu0 0.0
    %224 = vmatpush1.msra.mxu0 0.0
    %225 = vmatprep.mubr.f32.mxu0 0.0
    %226 = vmatmul.mubr.f32.gmra.mrb[0].mxu0 %v28
    %v227 = vpop.f32.mrb[0].mxu0
    %v228 = vadd.f32 %v143, %v227
    %v229 = vpop.f32.mrb[0].mxu0
    %230 = vmatprep.mubr.f32.mxu0 0.0
    %231 = vmatmul.mubr.f32.gmra.mrb[0].mxu0 %v29
    %v232 = vpop.f32.mrb[0].mxu0
    %v233 = vadd.f32 %v148, %v232
    %v234 = vpop.f32.mrb[0].mxu0
    %235 = vmatprep.mubr.f32.mxu0 0.0
    %236 = vmatmul.mubr.f32.gmra.mrb[0].mxu0 %v30
    %v237 = vpop.f32.mrb[0].mxu0
    %v238 = vadd.f32 %v153, %v237
    %v239 = vpop.f32.mrb[0].mxu0
    %240 = vmatprep.mubr.f32.mxu0 0.0
    %241 = vmatmul.mubr.f32.gmra.mrb[0].mxu0 %v31
    %v242 = vpop.f32.mrb[0].mxu0
    %v243 = vadd.f32 %v158, %v242
    %v244 = vpop.f32.mrb[0].mxu0
    %245 = vdwg.mxu0
    %v246 = vrot.slane %v28, 1
    %v247 = vrot.slane %v30, 1
    %v248 = vrot.slane %v29, 1
    %v249 = vrot.slane %v31, 1
    %vm250 = vcmp.lt.s32.totalorder %v54, 7
    %v251 = vsel %vm250, %v246, %v248
    %v252 = vsel %vm250, %v247, %v249
    %v253 = vsel %vm250, %v248, %v246
    %v254 = vsel %vm250, %v249, %v247
    %s255 = scalar_lea.vmem [#allocation2], 256
    %v256 = vld [vmem:[%s255] sm:$0xff]
    %v257 = vld [vmem:[%s255 + $0x8] sm:$0xff]
    %v258 = vld [vmem:[%s255 + $0x10] sm:$0xff]
    %v259 = vld [vmem:[%s255 + $0x18] sm:$0xff]
    %v260 = vld [vmem:[%s255 + $0x20] sm:$0xff]
    %v261 = vld [vmem:[%s255 + $0x28] sm:$0xff]
    %v262 = vld [vmem:[%s255 + $0x30] sm:$0xff]
    %v263 = vld [vmem:[%s255 + $0x38] sm:$0xff]
    %v264 = vld [vmem:[%s255 + $0x40] sm:$0xff]
    %v265 = vld [vmem:[%s255 + $0x48] sm:$0xff]
    %v266 = vld [vmem:[%s255 + $0x50] sm:$0xff]
    %v267 = vld [vmem:[%s255 + $0x58] sm:$0xff]
    %v268 = vld [vmem:[%s255 + $0x60] sm:$0xff]
    %v269 = vld [vmem:[%s255 + $0x68] sm:$0xff]
    %v270 = vld [vmem:[%s255 + $0x70] sm:$0xff]
    %v271 = vld [vmem:[%s255 + $0x78] sm:$0xff]
    %272 = vmatprep.subr.mxu0 0.0
    %273 = vmatpush1.msra.mxu0 %v256
    %274 = vmatprep.subr.mxu0 0.0
    %275 = vmatpush1.msra.mxu0 %v257
    %276 = vmatprep.subr.mxu0 0.0
    %277 = vmatpush1.msra.mxu0 %v258
    %278 = vmatprep.subr.mxu0 0.0
    %279 = vmatpush1.msra.mxu0 %v259
    %280 = vmatprep.subr.mxu0 0.0
    %281 = vmatpush1.msra.mxu0 %v260
    %282 = vmatprep.subr.mxu0 0.0
    %283 = vmatpush1.msra.mxu0 %v261
    %284 = vmatprep.subr.mxu0 0.0
    %285 = vmatpush1.msra.mxu0 %v262
    %286 = vmatprep.subr.mxu0 0.0
    %287 = vmatpush1.msra.mxu0 %v263
    %288 = vmatprep.subr.mxu0 0.0
    %289 = vmatpush1.msra.mxu0 %v264
    %290 = vmatprep.subr.mxu0 0.0
    %291 = vmatpush1.msra.mxu0 %v265
    %292 = vmatprep.subr.mxu0 0.0
    %293 = vmatpush1.msra.mxu0 %v266
    %294 = vmatprep.subr.mxu0 0.0
    %295 = vmatpush1.msra.mxu0 %v267
    %296 = vmatprep.subr.mxu0 0.0
    %297 = vmatpush1.msra.mxu0 %v268
    %298 = vmatprep.subr.mxu0 0.0
    %299 = vmatpush1.msra.mxu0 %v269
    %300 = vmatprep.subr.mxu0 0.0
    %301 = vmatpush1.msra.mxu0 %v270
    %302 = vmatprep.subr.mxu0 0.0
    %303 = vmatpush1.msra.mxu0 %v271
    %304 = vmatprep.subr.mxu0 0.0
    %305 = vmatpush1.msra.mxu0 0.0
    %306 = vmatprep.subr.mxu0 0.0
    %307 = vmatpush1.msra.mxu0 0.0
    %308 = vmatprep.subr.mxu0 0.0
    %309 = vmatpush1.msra.mxu0 0.0
    %310 = vmatprep.subr.mxu0 0.0
    %311 = vmatpush1.msra.mxu0 0.0
    %312 = vmatprep.subr.mxu0 0.0
    %313 = vmatpush1.msra.mxu0 0.0
    %314 = vmatprep.subr.mxu0 0.0
    %315 = vmatpush1.msra.mxu0 0.0
    %316 = vmatprep.subr.mxu0 0.0
    %317 = vmatpush1.msra.mxu0 0.0
    %318 = vmatprep.subr.mxu0 0.0
    %319 = vmatpush1.msra.mxu0 0.0
    %320 = vmatprep.subr.mxu0 0.0
    %321 = vmatpush1.msra.mxu0 0.0
    %322 = vmatprep.subr.mxu0 0.0
    %323 = vmatpush1.msra.mxu0 0.0
    %324 = vmatprep.subr.mxu0 0.0
    %325 = vmatpush1.msra.mxu0 0.0
    %326 = vmatprep.subr.mxu0 0.0
    %327 = vmatpush1.msra.mxu0 0.0
    %328 = vmatprep.subr.mxu0 0.0
    %329 = vmatpush1.msra.mxu0 0.0
    %330 = vmatprep.subr.mxu0 0.0
    %331 = vmatpush1.msra.mxu0 0.0
    %332 = vmatprep.subr.mxu0 0.0
    %333 = vmatpush1.msra.mxu0 0.0
    %334 = vmatprep.subr.mxu0 0.0
    %335 = vmatpush1.msra.mxu0 0.0
    %336 = vmatprep.mubr.f32.mxu0 0.0
    %337 = vmatmul.mubr.f32.gmra.mrb[0].mxu0 %v251
    %v338 = vpop.f32.mrb[0].mxu0
    %v339 = vadd.f32 0.0, %v338
    %v340 = vpop.f32.mrb[0].mxu0
    %341 = vmatprep.mubr.f32.mxu0 0.0
    %342 = vmatmul.mubr.f32.gmra.mrb[0].mxu0 %v253
    %v343 = vpop.f32.mrb[0].mxu0
    %v344 = vadd.f32 0.0, %v343
    %v345 = vpop.f32.mrb[0].mxu0
    %346 = vmatprep.mubr.f32.mxu0 0.0
    %347 = vmatmul.mubr.f32.gmra.mrb[0].mxu0 %v252
    %v348 = vpop.f32.mrb[0].mxu0
    %v349 = vadd.f32 0.0, %v348
    %v350 = vpop.f32.mrb[0].mxu0
    %351 = vmatprep.mubr.f32.mxu0 0.0
    %352 = vmatmul.mubr.f32.gmra.mrb[0].mxu0 %v254
    %v353 = vpop.f32.mrb[0].mxu0
    %v354 = vadd.f32 0.0, %v353
    %v355 = vpop.f32.mrb[0].mxu0
    %356 = vdwg.mxu0
    %v357 = vadd.f32 %v228, %v339
    %v358 = vadd.f32 %v233, %v344
    %v359 = vadd.f32 %v238, %v349
    %v360 = vadd.f32 %v243, %v354
    %v361 = vld [vmem:[%s2] sm:$0xff]
    %v362 = vld [vmem:[%s2 + $0x8] sm:$0xff]
    %vm363 = vcmask 130048
    %v365 = vsel %vm363, %v361, 0
    %v368 = vsel %vm363, %v362, 0
    %370 = vmatprep.subr.mxu0 0.0
    %371 = vmatpush1.msra.mxu0 %v28
    %372 = vmatprep.subr.mxu0 0.0
    %373 = vmatpush1.msra.mxu0 %v29
    %374 = vmatprep.subr.mxu0 0.0
    %375 = vmatpush1.msra.mxu0 0.0
    %376 = vmatprep.subr.mxu0 0.0
    %377 = vmatpush1.msra.mxu0 0.0
    %378 = vmatprep.subr.mxu0 0.0
    %379 = vmatpush1.msra.mxu0 0.0
    %380 = vmatprep.subr.mxu0 0.0
    %381 = vmatpush1.msra.mxu0 0.0
    %382 = vmatprep.subr.mxu0 0.0
    %383 = vmatpush1.msra.mxu0 0.0
    %384 = vmatprep.subr.mxu0 0.0
    %385 = vmatpush1.msra.mxu0 0.0
    %386 = vmatprep.subr.mxu0 0.0
    %387 = vmatpush1.msra.mxu0 0.0
    %388 = vmatprep.subr.mxu0 0.0
    %389 = vmatpush1.msra.mxu0 0.0
    %390 = vmatprep.subr.mxu0 0.0
    %391 = vmatpush1.msra.mxu0 0.0
    %392 = vmatprep.subr.mxu0 0.0
    %393 = vmatpush1.msra.mxu0 0.0
    %394 = vmatprep.subr.mxu0 0.0
    %395 = vmatpush1.msra.mxu0 0.0
    %396 = vmatprep.subr.mxu0 0.0
    %397 = vmatpush1.msra.mxu0 0.0
    %398 = vmatprep.subr.mxu0 0.0
    %399 = vmatpush1.msra.mxu0 0.0
    %400 = vmatprep.subr.mxu0 0.0
    %401 = vmatpush1.msra.mxu0 0.0
    %402 = vmatprep.subr.mxu0 0.0
    %403 = vmatpush1.msra.mxu0 0.0
    %404 = vmatprep.subr.mxu0 0.0
    %405 = vmatpush1.msra.mxu0 0.0
    %406 = vmatprep.subr.mxu0 0.0
    %407 = vmatpush1.msra.mxu0 0.0
    %408 = vmatprep.subr.mxu0 0.0
    %409 = vmatpush1.msra.mxu0 0.0
    %410 = vmatprep.subr.mxu0 0.0
    %411 = vmatpush1.msra.mxu0 0.0
    %412 = vmatprep.subr.mxu0 0.0
    %413 = vmatpush1.msra.mxu0 0.0
    %414 = vmatprep.subr.mxu0 0.0
    %415 = vmatpush1.msra.mxu0 0.0
    %416 = vmatprep.subr.mxu0 0.0
    %417 = vmatpush1.msra.mxu0 0.0
    %418 = vmatprep.subr.mxu0 0.0
    %419 = vmatpush1.msra.mxu0 0.0
    %420 = vmatprep.subr.mxu0 0.0
    %421 = vmatpush1.msra.mxu0 0.0
    %422 = vmatprep.subr.mxu0 0.0
    %423 = vmatpush1.msra.mxu0 0.0
    %424 = vmatprep.subr.mxu0 0.0
    %425 = vmatpush1.msra.mxu0 0.0
    %426 = vmatprep.subr.mxu0 0.0
    %427 = vmatpush1.msra.mxu0 0.0
    %428 = vmatprep.subr.mxu0 0.0
    %429 = vmatpush1.msra.mxu0 0.0
    %430 = vmatprep.subr.mxu0 0.0
    %431 = vmatpush1.msra.mxu0 0.0
    %432 = vmatprep.subr.mxu0 0.0
    %433 = vmatpush1.msra.mxu0 0.0
    %434 = vmatprep.mubr.f32.mxu0 0.0
    %435 = vmatmul.mubr.f32.gmra.mrb[0].mxu0 %v365
    %v436 = vpop.f32.mrb[0].mxu0
    %v437 = vadd.f32 0.0, %v436
    %v438 = vpop.f32.mrb[0].mxu0
    %439 = vmatprep.mubr.f32.mxu0 0.0
    %440 = vmatmul.mubr.f32.gmra.mrb[0].mxu0 %v368
    %v441 = vpop.f32.mrb[0].mxu0
    %v442 = vadd.f32 0.0, %v441
    %v443 = vpop.f32.mrb[0].mxu0
    %444 = vdwg.mxu0
    %445 = vmatprep.subr.mxu0 0.0
    %446 = vmatpush1.msra.mxu0 %v30
    %447 = vmatprep.subr.mxu0 0.0
    %448 = vmatpush1.msra.mxu0 %v31
    %449 = vmatprep.subr.mxu0 0.0
    %450 = vmatpush1.msra.mxu0 0.0
    %451 = vmatprep.subr.mxu0 0.0
    %452 = vmatpush1.msra.mxu0 0.0
    %453 = vmatprep.subr.mxu0 0.0
    %454 = vmatpush1.msra.mxu0 0.0
    %455 = vmatprep.subr.mxu0 0.0
    %456 = vmatpush1.msra.mxu0 0.0
    %457 = vmatprep.subr.mxu0 0.0
    %458 = vmatpush1.msra.mxu0 0.0
    %459 = vmatprep.subr.mxu0 0.0
    %460 = vmatpush1.msra.mxu0 0.0
    %461 = vmatprep.subr.mxu0 0.0
    %462 = vmatpush1.msra.mxu0 0.0
    %463 = vmatprep.subr.mxu0 0.0
    %464 = vmatpush1.msra.mxu0 0.0
    %465 = vmatprep.subr.mxu0 0.0
    %466 = vmatpush1.msra.mxu0 0.0
    %467 = vmatprep.subr.mxu0 0.0
    %468 = vmatpush1.msra.mxu0 0.0
    %469 = vmatprep.subr.mxu0 0.0
    %470 = vmatpush1.msra.mxu0 0.0
    %471 = vmatprep.subr.mxu0 0.0
    %472 = vmatpush1.msra.mxu0 0.0
    %473 = vmatprep.subr.mxu0 0.0
    %474 = vmatpush1.msra.mxu0 0.0
    %475 = vmatprep.subr.mxu0 0.0
    %476 = vmatpush1.msra.mxu0 0.0
    %477 = vmatprep.subr.mxu0 0.0
    %478 = vmatpush1.msra.mxu0 0.0
    %479 = vmatprep.subr.mxu0 0.0
    %480 = vmatpush1.msra.mxu0 0.0
    %481 = vmatprep.subr.mxu0 0.0
    %482 = vmatpush1.msra.mxu0 0.0
    %483 = vmatprep.subr.mxu0 0.0
    %484 = vmatpush1.msra.mxu0 0.0
    %485 = vmatprep.subr.mxu0 0.0
    %486 = vmatpush1.msra.mxu0 0.0
    %487 = vmatprep.subr.mxu0 0.0
    %488 = vmatpush1.msra.mxu0 0.0
    %489 = vmatprep.subr.mxu0 0.0
    %490 = vmatpush1.msra.mxu0 0.0
    %491 = vmatprep.subr.mxu0 0.0
    %492 = vmatpush1.msra.mxu0 0.0
    %493 = vmatprep.subr.mxu0 0.0
    %494 = vmatpush1.msra.mxu0 0.0
    %495 = vmatprep.subr.mxu0 0.0
    %496 = vmatpush1.msra.mxu0 0.0
    %497 = vmatprep.subr.mxu0 0.0
    %498 = vmatpush1.msra.mxu0 0.0
    %499 = vmatprep.subr.mxu0 0.0
    %500 = vmatpush1.msra.mxu0 0.0
    %501 = vmatprep.subr.mxu0 0.0
    %502 = vmatpush1.msra.mxu0 0.0
    %503 = vmatprep.subr.mxu0 0.0
    %504 = vmatpush1.msra.mxu0 0.0
    %505 = vmatprep.subr.mxu0 0.0
    %506 = vmatpush1.msra.mxu0 0.0
    %507 = vmatprep.subr.mxu0 0.0
    %508 = vmatpush1.msra.mxu0 0.0
    %509 = vmatprep.mubr.f32.mxu0 0.0
    %510 = vmatmul.mubr.f32.gmra.mrb[0].mxu0 %v365
    %v511 = vpop.f32.mrb[0].mxu0
    %v512 = vadd.f32 0.0, %v511
    %v513 = vpop.f32.mrb[0].mxu0
    %514 = vmatprep.mubr.f32.mxu0 0.0
    %515 = vmatmul.mubr.f32.gmra.mrb[0].mxu0 %v368
    %v516 = vpop.f32.mrb[0].mxu0
    %v517 = vadd.f32 0.0, %v516
    %v518 = vpop.f32.mrb[0].mxu0
    %519 = vdwg.mxu0
    %s520 = scalar_lea.vmem [#allocation2], 384
    %v521 = vld [vmem:[%s520] sm:$0xff]
    %v522 = vld [vmem:[%s520 + $0x8] sm:$0xff]
    %v523 = vld [vmem:[%s520 + $0x10] sm:$0xff]
    %v524 = vld [vmem:[%s520 + $0x18] sm:$0xff]
    %v525 = vld [vmem:[%s520 + $0x20] sm:$0xff]
    %v526 = vld [vmem:[%s520 + $0x28] sm:$0xff]
    %v527 = vld [vmem:[%s520 + $0x30] sm:$0xff]
    %v528 = vld [vmem:[%s520 + $0x38] sm:$0xff]
    %v529 = vld [vmem:[%s520 + $0x40] sm:$0xff]
    %v530 = vld [vmem:[%s520 + $0x48] sm:$0xff]
    %v531 = vld [vmem:[%s520 + $0x50] sm:$0xff]
    %v532 = vld [vmem:[%s520 + $0x58] sm:$0xff]
    %v533 = vld [vmem:[%s520 + $0x60] sm:$0xff]
    %v534 = vld [vmem:[%s520 + $0x68] sm:$0xff]
    %v535 = vld [vmem:[%s520 + $0x70] sm:$0xff]
    %v536 = vld [vmem:[%s520 + $0x78] sm:$0xff]
    %537 = vmatprep.subr.mxu0 0.0
    %538 = vmatpush1.msra.mxu0 %v521
    %539 = vmatprep.subr.mxu0 0.0
    %540 = vmatpush1.msra.mxu0 %v522
    %541 = vmatprep.subr.mxu0 0.0
    %542 = vmatpush1.msra.mxu0 %v523
    %543 = vmatprep.subr.mxu0 0.0
    %544 = vmatpush1.msra.mxu0 %v524
    %545 = vmatprep.subr.mxu0 0.0
    %546 = vmatpush1.msra.mxu0 %v525
    %547 = vmatprep.subr.mxu0 0.0
    %548 = vmatpush1.msra.mxu0 %v526
    %549 = vmatprep.subr.mxu0 0.0
    %550 = vmatpush1.msra.mxu0 %v527
    %551 = vmatprep.subr.mxu0 0.0
    %552 = vmatpush1.msra.mxu0 %v528
    %553 = vmatprep.subr.mxu0 0.0
    %554 = vmatpush1.msra.mxu0 %v529
    %555 = vmatprep.subr.mxu0 0.0
    %556 = vmatpush1.msra.mxu0 %v530
    %557 = vmatprep.subr.mxu0 0.0
    %558 = vmatpush1.msra.mxu0 %v531
    %559 = vmatprep.subr.mxu0 0.0
    %560 = vmatpush1.msra.mxu0 %v532
    %561 = vmatprep.subr.mxu0 0.0
    %562 = vmatpush1.msra.mxu0 %v533
    %563 = vmatprep.subr.mxu0 0.0
    %564 = vmatpush1.msra.mxu0 %v534
    %565 = vmatprep.subr.mxu0 0.0
    %566 = vmatpush1.msra.mxu0 %v535
    %567 = vmatprep.subr.mxu0 0.0
    %568 = vmatpush1.msra.mxu0 %v536
    %569 = vmatprep.subr.mxu0 0.0
    %570 = vmatpush1.msra.mxu0 0.0
    %571 = vmatprep.subr.mxu0 0.0
    %572 = vmatpush1.msra.mxu0 0.0
    %573 = vmatprep.subr.mxu0 0.0
    %574 = vmatpush1.msra.mxu0 0.0
    %575 = vmatprep.subr.mxu0 0.0
    %576 = vmatpush1.msra.mxu0 0.0
    %577 = vmatprep.subr.mxu0 0.0
    %578 = vmatpush1.msra.mxu0 0.0
    %579 = vmatprep.subr.mxu0 0.0
    %580 = vmatpush1.msra.mxu0 0.0
    %581 = vmatprep.subr.mxu0 0.0
    %582 = vmatpush1.msra.mxu0 0.0
    %583 = vmatprep.subr.mxu0 0.0
    %584 = vmatpush1.msra.mxu0 0.0
    %585 = vmatprep.subr.mxu0 0.0
    %586 = vmatpush1.msra.mxu0 0.0
    %587 = vmatprep.subr.mxu0 0.0
    %588 = vmatpush1.msra.mxu0 0.0
    %589 = vmatprep.subr.mxu0 0.0
    %590 = vmatpush1.msra.mxu0 0.0
    %591 = vmatprep.subr.mxu0 0.0
    %592 = vmatpush1.msra.mxu0 0.0
    %593 = vmatprep.subr.mxu0 0.0
    %594 = vmatpush1.msra.mxu0 0.0
    %595 = vmatprep.subr.mxu0 0.0
    %596 = vmatpush1.msra.mxu0 0.0
    %597 = vmatprep.subr.mxu0 0.0
    %598 = vmatpush1.msra.mxu0 0.0
    %599 = vmatprep.subr.mxu0 0.0
    %600 = vmatpush1.msra.mxu0 0.0
    %601 = vmatprep.mubr.f32.mxu0 0.0
    %602 = vmatmul.mubr.f32.gmra.mrb[0].mxu0 %v437
    %v603 = vpop.f32.mrb[0].mxu0
    %v604 = vadd.f32 0.0, %v603
    %v605 = vpop.f32.mrb[0].mxu0
    %606 = vmatprep.mubr.f32.mxu0 0.0
    %607 = vmatmul.mubr.f32.gmra.mrb[0].mxu0 %v442
    %v608 = vpop.f32.mrb[0].mxu0
    %v609 = vadd.f32 0.0, %v608
    %v610 = vpop.f32.mrb[0].mxu0
    %611 = vmatprep.mubr.f32.mxu0 0.0
    %612 = vmatmul.mubr.f32.gmra.mrb[0].mxu0 %v512
    %v613 = vpop.f32.mrb[0].mxu0
    %v614 = vadd.f32 0.0, %v613
    %v615 = vpop.f32.mrb[0].mxu0
    %616 = vmatprep.mubr.f32.mxu0 0.0
    %617 = vmatmul.mubr.f32.gmra.mrb[0].mxu0 %v517
    %v618 = vpop.f32.mrb[0].mxu0
    %v619 = vadd.f32 0.0, %v618
    %v620 = vpop.f32.mrb[0].mxu0
    %621 = vdwg.mxu0
    %v622 = vadd.f32 %v357, %v604
    %v623 = vadd.f32 %v358, %v609
    %v624 = vadd.f32 %v359, %v614
    %v625 = vadd.f32 %v360, %v619
    %v626 = vmax.f32 %v622, 0.0
    %v627 = vmax.f32 %v623, 0.0
    %v628 = vmax.f32 %v624, 0.0
    %v629 = vmax.f32 %v625, 0.0
    %630 = vst [vmem:[%s3] sm:$0xff] %v626
    %631 = vst [vmem:[%s3 + $0x8] sm:$0xff] %v627
    %632 = vst [vmem:[%s3 + $0x10] sm:$0xff] %v628
    %633 = vst [vmem:[%s3 + $0x18] sm:$0xff] %v629
    // Predicated region
    $region18: #{mixblock1_forward.1} parent=1 // pred_check
      _
    $region19: #{mixblock1_forward.1} parent=1 // pred_check_branch
      %635 = sbr.rel (0) target = $region21
    $region20: #{mixblock1_forward.1} parent=1 // pred_region
      _
    $region21: #{mixblock1_forward.1} parent=1 // pred_fallthru
      _
    // Predicated region
    $region22: #{mixblock1_forward.1} parent=1 // pred_check
      _
    $region23: #{mixblock1_forward.1} parent=1 // pred_check_branch
      %637 = sbr.rel (0) target = $region25
    $region24: #{mixblock1_forward.1} parent=1 // pred_region
      _
    $region25: #{mixblock1_forward.1} parent=1 // pred_fallthru
      _
    %638 = vsyncpa [#allocation3], 1

</llo_original>
